<compile_context>
chip_gen: v7x
topology: tpu7x:2x2x1
jax: 0.10.0
libtpu: 0.0.40
codegen_flags: <defaults>
</compile_context>

<pallas_src>
import jax
import jax.numpy as jnp
from jax.experimental import pallas as pl
from jax.experimental.pallas import tpu as pltpu


def basic_model_kernel(idx_ref, table_ref, emb_ref, pred_ref):
    """One grid step handles a tile of TB batch rows (batch in the lane dim).

    idx_ref   : VMEM ref, block (F, TB) int32      -- field indices, transposed
    table_ref : VMEM ref, block (D, V)  float32    -- transposed embedding table
    emb_ref   : VMEM out ref, block (F*D, TB)      -- transposed dense_input tile
    pred_ref  : VMEM out ref, block (1, TB)        -- sigmoid prediction row
    """
    D, V = table_ref.shape
    F, TB = idx_ref.shape

    table_t = table_ref[...]                                     # (D, V)
    idx = idx_ref[...]                                           # (F, TB)
    # Sublane iota of vocab ids, shared by all fields (hoisted out of the loop).
    v_iota = jax.lax.broadcasted_iota(jnp.int32, (V, TB), 0)     # (V, TB)

    sum_e = jnp.zeros((D, TB), jnp.float32)
    sum_sq = jnp.zeros((D, TB), jnp.float32)

    # F is small and static: full unroll keeps the scheduler's view simple and
    # each field's embedding slab is stored immediately (short live ranges).
    for f in range(F):
        # One-hot gather via the MXU: column tb of onehot_t selects row
        # idx[f, tb] of the table. Exact in f32; OOR indices give a zero column.
        onehot_t = (idx[f:f + 1, :] == v_iota).astype(table_t.dtype)        # (V, TB)
        emb_f = jnp.dot(table_t, onehot_t,
                        preferred_element_type=jnp.float32)                 # (D, TB)

        # Unmasked, lane-dense store of this field's slab into the output block.
        emb_ref[f * D:(f + 1) * D, :] = emb_f.astype(emb_ref.dtype)

        sum_e = sum_e + emb_f
        sum_sq = sum_sq + emb_f * emb_f

    # FM second-order term, reduced over the embedding dim (sublanes) per batch
    # column -> result is already lane-oriented, no transpose needed.
    second = 0.5 * jnp.sum(sum_e * sum_e - sum_sq, axis=0, keepdims=True)    # (1, TB)
    pred_ref[...] = jax.nn.sigmoid(second).astype(pred_ref.dtype)


def basic_model_forward(sparse_input, embedding_table, *, block_b=128):
    """sparse_input: (B, F) int32; embedding_table: (V, D) float32.

    Returns (dense_input (B, F, D), predict (B, 1)).
    block_b is the batch tile per grid step; kept a multiple of 128 so every
    block's last (lane) dimension is lane-dense.  Sweep 128/256/... for large B.
    """
    B, F = sparse_input.shape
    V, D = embedding_table.shape

    block_b = max(128, ((int(block_b) + 127) // 128) * 128)
    num_tiles = pl.cdiv(B, block_b)
    B_pad = num_tiles * block_b

    # Transposed, lane-dense layouts for the kernel (pure layout plumbing).
    idx_t = jnp.transpose(sparse_input.astype(jnp.int32))        # (F, B)
    if B_pad != B:
        idx_t = jnp.pad(idx_t, ((0, 0), (0, B_pad - B)))         # pad cols use index 0
    table_t = jnp.transpose(embedding_table)                     # (D, V)

    cost = pl.CostEstimate(
        flops=2 * B_pad * F * V * D        # one-hot gather matmuls
              + 6 * B_pad * F * D,         # FM elementwise / reductions
        transcendentals=B_pad,             # sigmoid
        bytes_accessed=(V * D * 4          # constant table block DMA'd once
                        + B_pad * F * 4    # indices in
                        + B_pad * F * D * 4  # embeddings out
                        + B_pad * 4),      # predictions out
    )

    emb_t, pred_row = pl.pallas_call(
        basic_model_kernel,
        out_shape=(
            jax.ShapeDtypeStruct((F * D, B_pad), embedding_table.dtype),
            jax.ShapeDtypeStruct((1, B_pad), jnp.float32),
        ),
        grid=(num_tiles,),
        in_specs=[
            # Lane-dense index tile for this batch slab.
            pl.BlockSpec((F, block_b), lambda t: (0, t)),
            # Whole (transposed) embedding table resident in VMEM; constant
            # index_map across the grid (small synthetic vocab).
            pl.BlockSpec((D, V), lambda t: (0, 0)),
        ],
        out_specs=(
            pl.BlockSpec((F * D, block_b), lambda t: (0, t)),
            pl.BlockSpec((1, block_b), lambda t: (0, t)),
        ),
        compiler_params=pltpu.CompilerParams(
            dimension_semantics=("parallel",),
            vmem_limit_bytes=32 * 1024 * 1024,
        ),
        cost_estimate=cost,
    )(idx_t, table_t)

    # Undo the transposed/padded layout: (F*D, B_pad) -> (B, F, D).
    dense_input = jnp.transpose(emb_t).reshape(B_pad, F, D)[:B]
    predict = pred_row[0, :B].reshape(B, 1)
    return dense_input, predict


if __name__ == "__main__":
    # Small, deterministic synthetic config: batch=2, fields=8, vocab=64, dim=32.
    B, F, V, D = 2, 8, 64, 32
    key = jax.random.PRNGKey(0)
    k_idx, k_tab = jax.random.split(key)

    sparse_input = jax.random.randint(k_idx, (B, F), 0, V, dtype=jnp.int32)
    embedding_table = (0.1 * jax.random.normal(k_tab, (V, D))).astype(jnp.float32)

    dense_input, predict = basic_model_forward(sparse_input, embedding_table)
    jax.block_until_ready((dense_input, predict))

    # Reference in plain JAX (embedding lookup + FM interaction + sigmoid).
    emb_ref = embedding_table[sparse_input]                       # (B, F, D)
    s = emb_ref.sum(axis=1)
    ss = (emb_ref * emb_ref).sum(axis=1)
    pred_ref = jax.nn.sigmoid(0.5 * (s * s - ss).sum(axis=-1, keepdims=True))

    assert jnp.allclose(dense_input, emb_ref, atol=1e-5, rtol=1e-5)
    assert jnp.allclose(predict, pred_ref, atol=1e-5, rtol=1e-5)

    print("KERNEL_OK")
</pallas_src>

<mosaic_0001>
module attributes {stable_mosaic.version = 11 : i64} {
  func.func @basic_model_kernel(%arg0: i32, %arg1: memref<8x128xi32, #tpu.memory_space<vmem>>, %arg2: memref<32x64xf32, #tpu.memory_space<vmem>>, %arg3: memref<256x128xf32, #tpu.memory_space<vmem>>, %arg4: memref<1x128xf32, #tpu.memory_space<vmem>>) attributes {dimension_semantics = [#tpu.dimension_semantics<parallel>], iteration_bounds = array<i64: 1>, scalar_prefetch = 0 : i64, scratch_operands = 0 : i64, tpu.core_type = #tpu.core_type<tc>, window_params = [{transform_indices = @transform_0, window_bounds = array<i64: 8, 128>}, {pipeline_mode = #tpu.pipeline_mode<synchronous>, transform_indices = @transform_1, window_bounds = array<i64: 32, 64>}, {transform_indices = @transform_2, window_bounds = array<i64: 256, 128>}, {transform_indices = @transform_3, window_bounds = array<i64: 1, 128>}]} {
    %c0 = arith.constant 0 : index
    %c0_0 = arith.constant 0 : index
    %0 = vector.load %arg2[%c0, %c0_0] : memref<32x64xf32, #tpu.memory_space<vmem>>, vector<32x64xf32>
    %c0_1 = arith.constant 0 : index
    %c0_2 = arith.constant 0 : index
    %1 = vector.load %arg1[%c0_1, %c0_2] : memref<8x128xi32, #tpu.memory_space<vmem>>, vector<8x128xi32>
    %2 = tpu.iota {dimensions = array<i32: 0>} : vector<64x128xi32>
    %cst = arith.constant 0.000000e+00 : f32
    %3 = vector.broadcast %cst : f32 to vector<32x128xf32>
    %cst_3 = arith.constant 0.000000e+00 : f32
    %4 = vector.broadcast %cst_3 : f32 to vector<32x128xf32>
    %5 = vector.extract_strided_slice %1 {offsets = [0, 0], sizes = [1, 128], strides = [1, 1]} : vector<8x128xi32> to vector<1x128xi32>
    %6 = vector.broadcast %5 : vector<1x128xi32> to vector<64x128xi32>
    %7 = arith.cmpi eq, %6, %2 : vector<64x128xi32>
    %8 = arith.extui %7 : vector<64x128xi1> to vector<64x128xi32>
    %9 = arith.sitofp %8 : vector<64x128xi32> to vector<64x128xf32>
    %cst_4 = arith.constant dense<0.000000e+00> : vector<32x128xf32>
    %10 = tpu.matmul %0, %9, %cst_4 {dimension_numbers = #tpu.dot_dimension_numbers<[1], [0], [0], [1], [0, 0, 1, 1], [], []>} : vector<32x64xf32>, vector<64x128xf32>, vector<32x128xf32> -> vector<32x128xf32>
    %c0_5 = arith.constant 0 : index
    %c0_6 = arith.constant 0 : index
    %11 = vector.load %arg3[%c0_5, %c0_6] : memref<256x128xf32, #tpu.memory_space<vmem>>, vector<32x128xf32>
    tpu.vector_store %arg3[%c0_5, %c0_6], %10 {strides = array<i32>} : memref<256x128xf32, #tpu.memory_space<vmem>>, vector<32x128xf32>,
    %12 = arith.addf %3, %10 : vector<32x128xf32>
    %13 = arith.mulf %10, %10 : vector<32x128xf32>
    %14 = arith.addf %4, %13 : vector<32x128xf32>
    %15 = vector.extract_strided_slice %1 {offsets = [1, 0], sizes = [1, 128], strides = [1, 1]} : vector<8x128xi32> to vector<1x128xi32>
    %16 = vector.broadcast %15 : vector<1x128xi32> to vector<64x128xi32>
    %17 = arith.cmpi eq, %16, %2 : vector<64x128xi32>
    %18 = arith.extui %17 : vector<64x128xi1> to vector<64x128xi32>
    %19 = arith.sitofp %18 : vector<64x128xi32> to vector<64x128xf32>
    %cst_7 = arith.constant dense<0.000000e+00> : vector<32x128xf32>
    %20 = tpu.matmul %0, %19, %cst_7 {dimension_numbers = #tpu.dot_dimension_numbers<[1], [0], [0], [1], [0, 0, 1, 1], [], []>} : vector<32x64xf32>, vector<64x128xf32>, vector<32x128xf32> -> vector<32x128xf32>
    %c32 = arith.constant 32 : index
    %c0_8 = arith.constant 0 : index
    %21 = vector.load %arg3[%c32, %c0_8] : memref<256x128xf32, #tpu.memory_space<vmem>>, vector<32x128xf32>
    tpu.vector_store %arg3[%c32, %c0_8], %20 {strides = array<i32>} : memref<256x128xf32, #tpu.memory_space<vmem>>, vector<32x128xf32>,
    %22 = arith.addf %12, %20 : vector<32x128xf32>
    %23 = arith.mulf %20, %20 : vector<32x128xf32>
    %24 = arith.addf %14, %23 : vector<32x128xf32>
    %25 = vector.extract_strided_slice %1 {offsets = [2, 0], sizes = [1, 128], strides = [1, 1]} : vector<8x128xi32> to vector<1x128xi32>
    %26 = vector.broadcast %25 : vector<1x128xi32> to vector<64x128xi32>
    %27 = arith.cmpi eq, %26, %2 : vector<64x128xi32>
    %28 = arith.extui %27 : vector<64x128xi1> to vector<64x128xi32>
    %29 = arith.sitofp %28 : vector<64x128xi32> to vector<64x128xf32>
    %cst_9 = arith.constant dense<0.000000e+00> : vector<32x128xf32>
    %30 = tpu.matmul %0, %29, %cst_9 {dimension_numbers = #tpu.dot_dimension_numbers<[1], [0], [0], [1], [0, 0, 1, 1], [], []>} : vector<32x64xf32>, vector<64x128xf32>, vector<32x128xf32> -> vector<32x128xf32>
    %c64 = arith.constant 64 : index
    %c0_10 = arith.constant 0 : index
    %31 = vector.load %arg3[%c64, %c0_10] : memref<256x128xf32, #tpu.memory_space<vmem>>, vector<32x128xf32>
    tpu.vector_store %arg3[%c64, %c0_10], %30 {strides = array<i32>} : memref<256x128xf32, #tpu.memory_space<vmem>>, vector<32x128xf32>,
    %32 = arith.addf %22, %30 : vector<32x128xf32>
    %33 = arith.mulf %30, %30 : vector<32x128xf32>
    %34 = arith.addf %24, %33 : vector<32x128xf32>
    %35 = vector.extract_strided_slice %1 {offsets = [3, 0], sizes = [1, 128], strides = [1, 1]} : vector<8x128xi32> to vector<1x128xi32>
    %36 = vector.broadcast %35 : vector<1x128xi32> to vector<64x128xi32>
    %37 = arith.cmpi eq, %36, %2 : vector<64x128xi32>
    %38 = arith.extui %37 : vector<64x128xi1> to vector<64x128xi32>
    %39 = arith.sitofp %38 : vector<64x128xi32> to vector<64x128xf32>
    %cst_11 = arith.constant dense<0.000000e+00> : vector<32x128xf32>
    %40 = tpu.matmul %0, %39, %cst_11 {dimension_numbers = #tpu.dot_dimension_numbers<[1], [0], [0], [1], [0, 0, 1, 1], [], []>} : vector<32x64xf32>, vector<64x128xf32>, vector<32x128xf32> -> vector<32x128xf32>
    %c96 = arith.constant 96 : index
    %c0_12 = arith.constant 0 : index
    %41 = vector.load %arg3[%c96, %c0_12] : memref<256x128xf32, #tpu.memory_space<vmem>>, vector<32x128xf32>
    tpu.vector_store %arg3[%c96, %c0_12], %40 {strides = array<i32>} : memref<256x128xf32, #tpu.memory_space<vmem>>, vector<32x128xf32>,
    %42 = arith.addf %32, %40 : vector<32x128xf32>
    %43 = arith.mulf %40, %40 : vector<32x128xf32>
    %44 = arith.addf %34, %43 : vector<32x128xf32>
    %45 = vector.extract_strided_slice %1 {offsets = [4, 0], sizes = [1, 128], strides = [1, 1]} : vector<8x128xi32> to vector<1x128xi32>
    %46 = vector.broadcast %45 : vector<1x128xi32> to vector<64x128xi32>
    %47 = arith.cmpi eq, %46, %2 : vector<64x128xi32>
    %48 = arith.extui %47 : vector<64x128xi1> to vector<64x128xi32>
    %49 = arith.sitofp %48 : vector<64x128xi32> to vector<64x128xf32>
    %cst_13 = arith.constant dense<0.000000e+00> : vector<32x128xf32>
    %50 = tpu.matmul %0, %49, %cst_13 {dimension_numbers = #tpu.dot_dimension_numbers<[1], [0], [0], [1], [0, 0, 1, 1], [], []>} : vector<32x64xf32>, vector<64x128xf32>, vector<32x128xf32> -> vector<32x128xf32>
    %c128 = arith.constant 128 : index
    %c0_14 = arith.constant 0 : index
    %51 = vector.load %arg3[%c128, %c0_14] : memref<256x128xf32, #tpu.memory_space<vmem>>, vector<32x128xf32>
    tpu.vector_store %arg3[%c128, %c0_14], %50 {strides = array<i32>} : memref<256x128xf32, #tpu.memory_space<vmem>>, vector<32x128xf32>,
    %52 = arith.addf %42, %50 : vector<32x128xf32>
    %53 = arith.mulf %50, %50 : vector<32x128xf32>
    %54 = arith.addf %44, %53 : vector<32x128xf32>
    %55 = vector.extract_strided_slice %1 {offsets = [5, 0], sizes = [1, 128], strides = [1, 1]} : vector<8x128xi32> to vector<1x128xi32>
    %56 = vector.broadcast %55 : vector<1x128xi32> to vector<64x128xi32>
    %57 = arith.cmpi eq, %56, %2 : vector<64x128xi32>
    %58 = arith.extui %57 : vector<64x128xi1> to vector<64x128xi32>
    %59 = arith.sitofp %58 : vector<64x128xi32> to vector<64x128xf32>
    %cst_15 = arith.constant dense<0.000000e+00> : vector<32x128xf32>
    %60 = tpu.matmul %0, %59, %cst_15 {dimension_numbers = #tpu.dot_dimension_numbers<[1], [0], [0], [1], [0, 0, 1, 1], [], []>} : vector<32x64xf32>, vector<64x128xf32>, vector<32x128xf32> -> vector<32x128xf32>
    %c160 = arith.constant 160 : index
    %c0_16 = arith.constant 0 : index
    %61 = vector.load %arg3[%c160, %c0_16] : memref<256x128xf32, #tpu.memory_space<vmem>>, vector<32x128xf32>
    tpu.vector_store %arg3[%c160, %c0_16], %60 {strides = array<i32>} : memref<256x128xf32, #tpu.memory_space<vmem>>, vector<32x128xf32>,
    %62 = arith.addf %52, %60 : vector<32x128xf32>
    %63 = arith.mulf %60, %60 : vector<32x128xf32>
    %64 = arith.addf %54, %63 : vector<32x128xf32>
    %65 = vector.extract_strided_slice %1 {offsets = [6, 0], sizes = [1, 128], strides = [1, 1]} : vector<8x128xi32> to vector<1x128xi32>
    %66 = vector.broadcast %65 : vector<1x128xi32> to vector<64x128xi32>
    %67 = arith.cmpi eq, %66, %2 : vector<64x128xi32>
    %68 = arith.extui %67 : vector<64x128xi1> to vector<64x128xi32>
    %69 = arith.sitofp %68 : vector<64x128xi32> to vector<64x128xf32>
    %cst_17 = arith.constant dense<0.000000e+00> : vector<32x128xf32>
    %70 = tpu.matmul %0, %69, %cst_17 {dimension_numbers = #tpu.dot_dimension_numbers<[1], [0], [0], [1], [0, 0, 1, 1], [], []>} : vector<32x64xf32>, vector<64x128xf32>, vector<32x128xf32> -> vector<32x128xf32>
    %c192 = arith.constant 192 : index
    %c0_18 = arith.constant 0 : index
    %71 = vector.load %arg3[%c192, %c0_18] : memref<256x128xf32, #tpu.memory_space<vmem>>, vector<32x128xf32>
    tpu.vector_store %arg3[%c192, %c0_18], %70 {strides = array<i32>} : memref<256x128xf32, #tpu.memory_space<vmem>>, vector<32x128xf32>,
    %72 = arith.addf %62, %70 : vector<32x128xf32>
    %73 = arith.mulf %70, %70 : vector<32x128xf32>
    %74 = arith.addf %64, %73 : vector<32x128xf32>
    %75 = vector.extract_strided_slice %1 {offsets = [7, 0], sizes = [1, 128], strides = [1, 1]} : vector<8x128xi32> to vector<1x128xi32>
    %76 = vector.broadcast %75 : vector<1x128xi32> to vector<64x128xi32>
    %77 = arith.cmpi eq, %76, %2 : vector<64x128xi32>
    %78 = arith.extui %77 : vector<64x128xi1> to vector<64x128xi32>
    %79 = arith.sitofp %78 : vector<64x128xi32> to vector<64x128xf32>
    %cst_19 = arith.constant dense<0.000000e+00> : vector<32x128xf32>
    %80 = tpu.matmul %0, %79, %cst_19 {dimension_numbers = #tpu.dot_dimension_numbers<[1], [0], [0], [1], [0, 0, 1, 1], [], []>} : vector<32x64xf32>, vector<64x128xf32>, vector<32x128xf32> -> vector<32x128xf32>
    %c224 = arith.constant 224 : index
    %c0_20 = arith.constant 0 : index
    %81 = vector.load %arg3[%c224, %c0_20] : memref<256x128xf32, #tpu.memory_space<vmem>>, vector<32x128xf32>
    tpu.vector_store %arg3[%c224, %c0_20], %80 {strides = array<i32>} : memref<256x128xf32, #tpu.memory_space<vmem>>, vector<32x128xf32>,
    %82 = arith.addf %72, %80 : vector<32x128xf32>
    %83 = arith.mulf %80, %80 : vector<32x128xf32>
    %84 = arith.addf %74, %83 : vector<32x128xf32>
    %85 = arith.mulf %82, %82 : vector<32x128xf32>
    %86 = arith.subf %85, %84 : vector<32x128xf32>
    %cst_21 = arith.constant dense<0.000000e+00> : vector<128xf32>
    %87 = vector.multi_reduction <add>, %86, %cst_21 [0] : vector<32x128xf32> to vector<128xf32>
    %88 = vector.shape_cast %87 : vector<128xf32> to vector<1x128xf32>
    %cst_22 = arith.constant 5.000000e-01 : f32
    %89 = vector.broadcast %cst_22 : f32 to vector<1x128xf32>
    %90 = arith.mulf %89, %88 : vector<1x128xf32>
    %91 = arith.negf %90 : vector<1x128xf32>
    %92 = math.exp %91 : vector<1x128xf32>
    %cst_23 = arith.constant 1.000000e+00 : f32
    %93 = vector.broadcast %cst_23 : f32 to vector<1x128xf32>
    %94 = arith.addf %93, %92 : vector<1x128xf32>
    %95 = arith.divf %93, %94 : vector<1x128xf32>
    %c0_24 = arith.constant 0 : index
    %c0_25 = arith.constant 0 : index
    %96 = vector.load %arg4[%c0_24, %c0_25] : memref<1x128xf32, #tpu.memory_space<vmem>>, vector<1x128xf32>
    tpu.vector_store %arg4[%c0_24, %c0_25], %95 {strides = array<i32>} : memref<1x128xf32, #tpu.memory_space<vmem>>, vector<1x128xf32>,
    return
  }
  func.func @transform_0(%arg0: i32) -> (i32, i32) {
    %c0_i32 = arith.constant 0 : i32
    %c0_i32_0 = arith.constant 0 : i32
    return %c0_i32, %arg0 : i32, i32
  }
  func.func @transform_1(%arg0: i32) -> (i32, i32) {
    %c0_i32 = arith.constant 0 : i32
    %c0_i32_0 = arith.constant 0 : i32
    %c0_i32_1 = arith.constant 0 : i32
    return %c0_i32, %c0_i32_0 : i32, i32
  }
  func.func @transform_2(%arg0: i32) -> (i32, i32) {
    %c0_i32 = arith.constant 0 : i32
    %c0_i32_0 = arith.constant 0 : i32
    return %c0_i32, %arg0 : i32, i32
  }
  func.func @transform_3(%arg0: i32) -> (i32, i32) {
    %c0_i32 = arith.constant 0 : i32
    %c0_i32_0 = arith.constant 0 : i32
    return %c0_i32, %arg0 : i32, i32
  }
}

</mosaic_0001>

<llo_original>
// kernel: tpu_custom_call.1
$region0: #{tpu_custom_call.1}
  #allocation0 [shape = 'u32[]', space=smem, size = 0x4, offset = 0x4, fixed_abs, tag = 'smem constant byte address 0x4 - core index']
  #allocation1 [shape = 'u32[144,128]{1,0:T(1,128)}', space=vmem, size = 0x12000, scoped, tag = 'internal scratch']
  %s0 = inlined_call_operand.hbm [shape: s32[8,128], index: 0, kind: input, shape index: {}]
  %s1 = inlined_call_operand.hbm [shape: f32[32,64], index: 1, kind: input, shape index: {}]
  %s2 = inlined_call_operand.hbm [shape: f32[256,128], index: 2, kind: output, shape index: {0}]
  %s3 = inlined_call_operand.hbm [shape: f32[1,128], index: 3, kind: output, shape index: {1}]
  %4 = xla_tuple %s2, %s3
  %s5 = sld [smem:[#allocation0]]
  $region34: #{tpu_custom_call.1} parent=0
    _
  %s7 = ssub.s32 1, %s5
  %s8 = scalar_select 0, %s7, %s5
  $region1: #{tpu_custom_call.1} parent=0
    #allocation2 [shape = 'u8[4096]{0}', space=vmem, size = 0x1000, scoped, tag = 'input window, operand 0, single buffered']
    #allocation3 [shape = 's32[1]{0}', space=sflag, size = 0x4, scoped, tag = 'scoped memory for tpu_custom_call.1']
    #allocation4 [shape = 's32[1]{0}', space=sflag, size = 0x4, scoped, tag = 'scoped memory for tpu_custom_call.1']
    #allocation5 [shape = 'u8[16384]{0}', space=vmem, size = 0x4000, scoped, tag = 'input window, operand 1, single buffered']
    #allocation6 [shape = 's32[1]{0}', space=sflag, size = 0x4, scoped, tag = 'scoped memory for tpu_custom_call.1']
    #allocation7 [shape = 'u8[131072]{0}', space=vmem, size = 0x20000, scoped, tag = 'output window, operand 0, single buffered']
    #allocation8 [shape = 'u8[512]{0}', space=vmem, size = 0x400, scoped, tag = 'output window, operand 1, single buffered']
    #allocation9 [shape = 's32[1]{0}', space=sflag, size = 0x4, scoped, tag = 'scoped memory for tpu_custom_call.1']
    %9 = vsyncpa [#allocation3], 0
    %10 = vsyncpa [#allocation6], 0
    %11 = vsyncpa [#allocation4], 0
    %12 = vsyncpa [#allocation9], 0
    // Predicated region
    $region2: #{tpu_custom_call.1} parent=1 // pred_check
      _
    $region3: #{tpu_custom_call.1} parent=1 // pred_check_branch
      %14 = sbr.rel (0) target = $region5
    $region4: #{tpu_custom_call.1} parent=1 // pred_region
      %s16 = ssub.s32 128, 128
      %17 = vsyncadd [#allocation3], %s16
      %s19 = sshll.u32 [#allocation2], 4
      %s20 = int_to_ptr.vmem [resolvable:$true] %s19
      %22 = dma.hbm_to_vmem [thread:$0]  %s0, 128, %s20, [#allocation3]
    $region5: #{tpu_custom_call.1} parent=1 // pred_fallthru
      _
    // Predicated region
    $region6: #{tpu_custom_call.1} parent=1 // pred_check
      _
    $region7: #{tpu_custom_call.1} parent=1 // pred_check_branch
      %24 = sbr.rel (0) target = $region9
    $region8: #{tpu_custom_call.1} parent=1 // pred_region
      %s26 = ssub.s32 512, 512
      %27 = vsyncadd [#allocation6], %s26
      %s28 = sshll.u32 [#allocation5], 4
      %s29 = int_to_ptr.vmem [resolvable:$true] %s28
      %34 = dma.hbm_to_vmem [thread:$0]  %s1, 512, %s29, [#allocation6], 128, 128, 8
    $region9: #{tpu_custom_call.1} parent=1 // pred_fallthru
      _
    // Predicated region
    $region10: #{tpu_custom_call.1} parent=1 // pred_check
      _
    $region11: #{tpu_custom_call.1} parent=1 // pred_check_branch
      %36 = sbr.rel (0) target = $region13
    $region12: #{tpu_custom_call.1} parent=1 // pred_region
      %37 = dma.done [#allocation3], 128
    $region13: #{tpu_custom_call.1} parent=1 // pred_fallthru
      _
    // Predicated region
    $region14: #{tpu_custom_call.1} parent=1 // pred_check
      _
    $region15: #{tpu_custom_call.1} parent=1 // pred_check_branch
      %39 = sbr.rel (0) target = $region17
    $region16: #{tpu_custom_call.1} parent=1 // pred_region
      %40 = dma.done [#allocation6], 512
    $region17: #{tpu_custom_call.1} parent=1 // pred_fallthru
      _
    %v41 = vld [vmem:[#allocation5] sm:$0xff]
    %v42 = vld [vmem:[#allocation5 + $0x8] sm:$0xff]
    %v43 = vld [vmem:[#allocation5 + $0x10] sm:$0xff]
    %v44 = vld [vmem:[#allocation5 + $0x18] sm:$0xff]
    %v45 = vld [vmem:[#allocation2] sm:$0xff]
    %v46 = vlaneseq
    %v47 = vshrl.u32 %v46, 7
    %v48 = vadd.s32 %v47, 8
    %v49 = vadd.s32 %v47, 16
    %v50 = vadd.s32 %v47, 24
    %v51 = vadd.s32 %v47, 32
    %v52 = vadd.s32 %v47, 40
    %v53 = vadd.s32 %v47, 48
    %v54 = vadd.s32 %v47, 56
    %v55 = vlaneseq
    %v56 = vshrl.u32 %v55, 7
    %v57 = vsub.s32 0, %v56
    %v58 = vrot.slane %v45, %v57
    %vm59 = vcmp.eq.s32.totalorder %v58, %v47
    %vm60 = vcmp.eq.s32.totalorder %v58, %v48
    %vm61 = vcmp.eq.s32.totalorder %v58, %v49
    %vm62 = vcmp.eq.s32.totalorder %v58, %v50
    %vm63 = vcmp.eq.s32.totalorder %v58, %v51
    %vm64 = vcmp.eq.s32.totalorder %v58, %v52
    %vm65 = vcmp.eq.s32.totalorder %v58, %v53
    %vm66 = vcmp.eq.s32.totalorder %v58, %v54
    %v67 = vsel %vm59, 1, 0
    %v68 = vsel %vm60, 1, 0
    %v69 = vsel %vm61, 1, 0
    %v70 = vsel %vm62, 1, 0
    %v71 = vsel %vm63, 1, 0
    %v72 = vsel %vm64, 1, 0
    %v73 = vsel %vm65, 1, 0
    %v74 = vsel %vm66, 1, 0
    %v75 = vcvt.s32.f32 %v67
    %v76 = vcvt.s32.f32 %v68
    %v77 = vcvt.s32.f32 %v69
    %v78 = vcvt.s32.f32 %v70
    %v79 = vcvt.s32.f32 %v71
    %v80 = vcvt.s32.f32 %v72
    %v81 = vcvt.s32.f32 %v73
    %v82 = vcvt.s32.f32 %v74
    %vm83 = vcmask 523264
    %v85 = vsel %vm83, %v41, 0
    %v88 = vsel %vm83, %v42, 0
    %v91 = vsel %vm83, %v43, 0
    %v94 = vsel %vm83, %v44, 0
    %96 = vmatprep.subr.mxu0 0.0
    %97 = vmatpush1.msra.mxu0 %v75
    %98 = vmatprep.subr.mxu0 0.0
    %99 = vmatpush1.msra.mxu0 %v76
    %100 = vmatprep.subr.mxu0 0.0
    %101 = vmatpush1.msra.mxu0 %v77
    %102 = vmatprep.subr.mxu0 0.0
    %103 = vmatpush1.msra.mxu0 %v78
    %104 = vmatprep.subr.mxu0 0.0
    %105 = vmatpush1.msra.mxu0 %v79
    %106 = vmatprep.subr.mxu0 0.0
    %107 = vmatpush1.msra.mxu0 %v80
    %108 = vmatprep.subr.mxu0 0.0
    %109 = vmatpush1.msra.mxu0 %v81
    %110 = vmatprep.subr.mxu0 0.0
    %111 = vmatpush1.msra.mxu0 %v82
    %112 = vmatprep.subr.mxu0 0.0
    %113 = vmatpush1.msra.mxu0 0.0
    %114 = vmatprep.subr.mxu0 0.0
    %115 = vmatpush1.msra.mxu0 0.0
    %116 = vmatprep.subr.mxu0 0.0
    %117 = vmatpush1.msra.mxu0 0.0
    %118 = vmatprep.subr.mxu0 0.0
    %119 = vmatpush1.msra.mxu0 0.0
    %120 = vmatprep.subr.mxu0 0.0
    %121 = vmatpush1.msra.mxu0 0.0
    %122 = vmatprep.subr.mxu0 0.0
    %123 = vmatpush1.msra.mxu0 0.0
    %124 = vmatprep.subr.mxu0 0.0
    %125 = vmatpush1.msra.mxu0 0.0
    %126 = vmatprep.subr.mxu0 0.0
    %127 = vmatpush1.msra.mxu0 0.0
    %128 = vmatprep.subr.mxu0 0.0
    %129 = vmatpush1.msra.mxu0 0.0
    %130 = vmatprep.subr.mxu0 0.0
    %131 = vmatpush1.msra.mxu0 0.0
    %132 = vmatprep.subr.mxu0 0.0
    %133 = vmatpush1.msra.mxu0 0.0
    %134 = vmatprep.subr.mxu0 0.0
    %135 = vmatpush1.msra.mxu0 0.0
    %136 = vmatprep.subr.mxu0 0.0
    %137 = vmatpush1.msra.mxu0 0.0
    %138 = vmatprep.subr.mxu0 0.0
    %139 = vmatpush1.msra.mxu0 0.0
    %140 = vmatprep.subr.mxu0 0.0
    %141 = vmatpush1.msra.mxu0 0.0
    %142 = vmatprep.subr.mxu0 0.0
    %143 = vmatpush1.msra.mxu0 0.0
    %144 = vmatprep.subr.mxu0 0.0
    %145 = vmatpush1.msra.mxu0 0.0
    %146 = vmatprep.subr.mxu0 0.0
    %147 = vmatpush1.msra.mxu0 0.0
    %148 = vmatprep.subr.mxu0 0.0
    %149 = vmatpush1.msra.mxu0 0.0
    %150 = vmatprep.subr.mxu0 0.0
    %151 = vmatpush1.msra.mxu0 0.0
    %152 = vmatprep.subr.mxu0 0.0
    %153 = vmatpush1.msra.mxu0 0.0
    %154 = vmatprep.subr.mxu0 0.0
    %155 = vmatpush1.msra.mxu0 0.0
    %156 = vmatprep.subr.mxu0 0.0
    %157 = vmatpush1.msra.mxu0 0.0
    %158 = vmatprep.subr.mxu0 0.0
    %159 = vmatpush1.msra.mxu0 0.0
    %160 = vmatprep.mubr.f32.mxu0 0.0
    %161 = vmatmul.mubr.f32.gmra.mrb[0].mxu0 %v85
    %v162 = vpop.f32.mrb[0].mxu0
    %v163 = vadd.f32 0.0, %v162
    %v164 = vpop.f32.mrb[0].mxu0
    %165 = vmatprep.mubr.f32.mxu0 0.0
    %166 = vmatmul.mubr.f32.gmra.mrb[0].mxu0 %v88
    %v167 = vpop.f32.mrb[0].mxu0
    %v168 = vadd.f32 0.0, %v167
    %v169 = vpop.f32.mrb[0].mxu0
    %170 = vmatprep.mubr.f32.mxu0 0.0
    %171 = vmatmul.mubr.f32.gmra.mrb[0].mxu0 %v91
    %v172 = vpop.f32.mrb[0].mxu0
    %v173 = vadd.f32 0.0, %v172
    %v174 = vpop.f32.mrb[0].mxu0
    %175 = vmatprep.mubr.f32.mxu0 0.0
    %176 = vmatmul.mubr.f32.gmra.mrb[0].mxu0 %v94
    %v177 = vpop.f32.mrb[0].mxu0
    %v178 = vadd.f32 0.0, %v177
    %v179 = vpop.f32.mrb[0].mxu0
    %180 = vdwg.mxu0
    %181 = vst [vmem:[#allocation7] sm:$0xff] %v163
    %182 = vst [vmem:[#allocation7 + $0x8] sm:$0xff] %v168
    %183 = vst [vmem:[#allocation7 + $0x10] sm:$0xff] %v173
    %184 = vst [vmem:[#allocation7 + $0x18] sm:$0xff] %v178
    %v185 = vadd.f32 %v163, 0.0
    %v186 = vadd.f32 %v168, 0.0
    %v187 = vadd.f32 %v173, 0.0
    %v188 = vadd.f32 %v178, 0.0
    %v189 = vmul.f32 %v163, %v163
    %v190 = vmul.f32 %v168, %v168
    %v191 = vmul.f32 %v173, %v173
    %v192 = vmul.f32 %v178, %v178
    %v193 = vadd.f32 %v189, 0.0
    %v194 = vadd.f32 %v190, 0.0
    %v195 = vadd.f32 %v191, 0.0
    %v196 = vadd.f32 %v192, 0.0
    %v197 = vlaneseq
    %v198 = vshrl.u32 %v197, 7
    %v199 = vsub.s32 1, %v198
    %v200 = vrot.slane %v45, %v199
    %vm201 = vcmp.eq.s32.totalorder %v200, %v47
    %vm202 = vcmp.eq.s32.totalorder %v200, %v48
    %vm203 = vcmp.eq.s32.totalorder %v200, %v49
    %vm204 = vcmp.eq.s32.totalorder %v200, %v50
    %vm205 = vcmp.eq.s32.totalorder %v200, %v51
    %vm206 = vcmp.eq.s32.totalorder %v200, %v52
    %vm207 = vcmp.eq.s32.totalorder %v200, %v53
    %vm208 = vcmp.eq.s32.totalorder %v200, %v54
    %v209 = vsel %vm201, 1, 0
    %v210 = vsel %vm202, 1, 0
    %v211 = vsel %vm203, 1, 0
    %v212 = vsel %vm204, 1, 0
    %v213 = vsel %vm205, 1, 0
    %v214 = vsel %vm206, 1, 0
    %v215 = vsel %vm207, 1, 0
    %v216 = vsel %vm208, 1, 0
    %v217 = vcvt.s32.f32 %v209
    %v218 = vcvt.s32.f32 %v210
    %v219 = vcvt.s32.f32 %v211
    %v220 = vcvt.s32.f32 %v212
    %v221 = vcvt.s32.f32 %v213
    %v222 = vcvt.s32.f32 %v214
    %v223 = vcvt.s32.f32 %v215
    %v224 = vcvt.s32.f32 %v216
    %225 = vmatprep.subr.mxu0 0.0
    %226 = vmatpush1.msra.mxu0 %v217
    %227 = vmatprep.subr.mxu0 0.0
    %228 = vmatpush1.msra.mxu0 %v218
    %229 = vmatprep.subr.mxu0 0.0
    %230 = vmatpush1.msra.mxu0 %v219
    %231 = vmatprep.subr.mxu0 0.0
    %232 = vmatpush1.msra.mxu0 %v220
    %233 = vmatprep.subr.mxu0 0.0
    %234 = vmatpush1.msra.mxu0 %v221
    %235 = vmatprep.subr.mxu0 0.0
    %236 = vmatpush1.msra.mxu0 %v222
    %237 = vmatprep.subr.mxu0 0.0
    %238 = vmatpush1.msra.mxu0 %v223
    %239 = vmatprep.subr.mxu0 0.0
    %240 = vmatpush1.msra.mxu0 %v224
    %241 = vmatprep.subr.mxu0 0.0
    %242 = vmatpush1.msra.mxu0 0.0
    %243 = vmatprep.subr.mxu0 0.0
    %244 = vmatpush1.msra.mxu0 0.0
    %245 = vmatprep.subr.mxu0 0.0
    %246 = vmatpush1.msra.mxu0 0.0
    %247 = vmatprep.subr.mxu0 0.0
    %248 = vmatpush1.msra.mxu0 0.0
    %249 = vmatprep.subr.mxu0 0.0
    %250 = vmatpush1.msra.mxu0 0.0
    %251 = vmatprep.subr.mxu0 0.0
    %252 = vmatpush1.msra.mxu0 0.0
    %253 = vmatprep.subr.mxu0 0.0
    %254 = vmatpush1.msra.mxu0 0.0
    %255 = vmatprep.subr.mxu0 0.0
    %256 = vmatpush1.msra.mxu0 0.0
    %257 = vmatprep.subr.mxu0 0.0
    %258 = vmatpush1.msra.mxu0 0.0
    %259 = vmatprep.subr.mxu0 0.0
    %260 = vmatpush1.msra.mxu0 0.0
    %261 = vmatprep.subr.mxu0 0.0
    %262 = vmatpush1.msra.mxu0 0.0
    %263 = vmatprep.subr.mxu0 0.0
    %264 = vmatpush1.msra.mxu0 0.0
    %265 = vmatprep.subr.mxu0 0.0
    %266 = vmatpush1.msra.mxu0 0.0
    %267 = vmatprep.subr.mxu0 0.0
    %268 = vmatpush1.msra.mxu0 0.0
    %269 = vmatprep.subr.mxu0 0.0
    %270 = vmatpush1.msra.mxu0 0.0
    %271 = vmatprep.subr.mxu0 0.0
    %272 = vmatpush1.msra.mxu0 0.0
    %273 = vmatprep.subr.mxu0 0.0
    %274 = vmatpush1.msra.mxu0 0.0
    %275 = vmatprep.subr.mxu0 0.0
    %276 = vmatpush1.msra.mxu0 0.0
    %277 = vmatprep.subr.mxu0 0.0
    %278 = vmatpush1.msra.mxu0 0.0
    %279 = vmatprep.subr.mxu0 0.0
    %280 = vmatpush1.msra.mxu0 0.0
    %281 = vmatprep.subr.mxu0 0.0
    %282 = vmatpush1.msra.mxu0 0.0
    %283 = vmatprep.subr.mxu0 0.0
    %284 = vmatpush1.msra.mxu0 0.0
    %285 = vmatprep.subr.mxu0 0.0
    %286 = vmatpush1.msra.mxu0 0.0
    %287 = vmatprep.subr.mxu0 0.0
    %288 = vmatpush1.msra.mxu0 0.0
    %289 = vmatprep.mubr.f32.mxu0 0.0
    %290 = vmatmul.mubr.f32.gmra.mrb[0].mxu0 %v85
    %v291 = vpop.f32.mrb[0].mxu0
    %v292 = vadd.f32 0.0, %v291
    %v293 = vpop.f32.mrb[0].mxu0
    %294 = vmatprep.mubr.f32.mxu0 0.0
    %295 = vmatmul.mubr.f32.gmra.mrb[0].mxu0 %v88
    %v296 = vpop.f32.mrb[0].mxu0
    %v297 = vadd.f32 0.0, %v296
    %v298 = vpop.f32.mrb[0].mxu0
    %299 = vmatprep.mubr.f32.mxu0 0.0
    %300 = vmatmul.mubr.f32.gmra.mrb[0].mxu0 %v91
    %v301 = vpop.f32.mrb[0].mxu0
    %v302 = vadd.f32 0.0, %v301
    %v303 = vpop.f32.mrb[0].mxu0
    %304 = vmatprep.mubr.f32.mxu0 0.0
    %305 = vmatmul.mubr.f32.gmra.mrb[0].mxu0 %v94
    %v306 = vpop.f32.mrb[0].mxu0
    %v307 = vadd.f32 0.0, %v306
    %v308 = vpop.f32.mrb[0].mxu0
    %309 = vdwg.mxu0
    %310 = vst [vmem:[#allocation7 + $0x20] sm:$0xff] %v292
    %311 = vst [vmem:[#allocation7 + $0x28] sm:$0xff] %v297
    %312 = vst [vmem:[#allocation7 + $0x30] sm:$0xff] %v302
    %313 = vst [vmem:[#allocation7 + $0x38] sm:$0xff] %v307
    %v314 = vadd.f32 %v185, %v292
    %v315 = vadd.f32 %v186, %v297
    %v316 = vadd.f32 %v187, %v302
    %v317 = vadd.f32 %v188, %v307
    %v318 = vmul.f32 %v292, %v292
    %v319 = vmul.f32 %v297, %v297
    %v320 = vmul.f32 %v302, %v302
    %v321 = vmul.f32 %v307, %v307
    %v322 = vadd.f32 %v193, %v318
    %v323 = vadd.f32 %v194, %v319
    %v324 = vadd.f32 %v195, %v320
    %v325 = vadd.f32 %v196, %v321
    %v326 = vlaneseq
    %v327 = vshrl.u32 %v326, 7
    %v328 = vsub.s32 2, %v327
    %v329 = vrot.slane %v45, %v328
    %vm330 = vcmp.eq.s32.totalorder %v329, %v47
    %vm331 = vcmp.eq.s32.totalorder %v329, %v48
    %vm332 = vcmp.eq.s32.totalorder %v329, %v49
    %vm333 = vcmp.eq.s32.totalorder %v329, %v50
    %vm334 = vcmp.eq.s32.totalorder %v329, %v51
    %vm335 = vcmp.eq.s32.totalorder %v329, %v52
    %vm336 = vcmp.eq.s32.totalorder %v329, %v53
    %vm337 = vcmp.eq.s32.totalorder %v329, %v54
    %v338 = vsel %vm330, 1, 0
    %v339 = vsel %vm331, 1, 0
    %v340 = vsel %vm332, 1, 0
    %v341 = vsel %vm333, 1, 0
    %v342 = vsel %vm334, 1, 0
    %v343 = vsel %vm335, 1, 0
    %v344 = vsel %vm336, 1, 0
    %v345 = vsel %vm337, 1, 0
    %v346 = vcvt.s32.f32 %v338
    %v347 = vcvt.s32.f32 %v339
    %v348 = vcvt.s32.f32 %v340
    %v349 = vcvt.s32.f32 %v341
    %v350 = vcvt.s32.f32 %v342
    %v351 = vcvt.s32.f32 %v343
    %v352 = vcvt.s32.f32 %v344
    %v353 = vcvt.s32.f32 %v345
    %354 = vmatprep.subr.mxu0 0.0
    %355 = vmatpush1.msra.mxu0 %v346
    %356 = vmatprep.subr.mxu0 0.0
    %357 = vmatpush1.msra.mxu0 %v347
    %358 = vmatprep.subr.mxu0 0.0
    %359 = vmatpush1.msra.mxu0 %v348
    %360 = vmatprep.subr.mxu0 0.0
    %361 = vmatpush1.msra.mxu0 %v349
    %362 = vmatprep.subr.mxu0 0.0
    %363 = vmatpush1.msra.mxu0 %v350
    %364 = vmatprep.subr.mxu0 0.0
    %365 = vmatpush1.msra.mxu0 %v351
    %366 = vmatprep.subr.mxu0 0.0
    %367 = vmatpush1.msra.mxu0 %v352
    %368 = vmatprep.subr.mxu0 0.0
    %369 = vmatpush1.msra.mxu0 %v353
    %370 = vmatprep.subr.mxu0 0.0
    %371 = vmatpush1.msra.mxu0 0.0
    %372 = vmatprep.subr.mxu0 0.0
    %373 = vmatpush1.msra.mxu0 0.0
    %374 = vmatprep.subr.mxu0 0.0
    %375 = vmatpush1.msra.mxu0 0.0
    %376 = vmatprep.subr.mxu0 0.0
    %377 = vmatpush1.msra.mxu0 0.0
    %378 = vmatprep.subr.mxu0 0.0
    %379 = vmatpush1.msra.mxu0 0.0
    %380 = vmatprep.subr.mxu0 0.0
    %381 = vmatpush1.msra.mxu0 0.0
    %382 = vmatprep.subr.mxu0 0.0
    %383 = vmatpush1.msra.mxu0 0.0
    %384 = vmatprep.subr.mxu0 0.0
    %385 = vmatpush1.msra.mxu0 0.0
    %386 = vmatprep.subr.mxu0 0.0
    %387 = vmatpush1.msra.mxu0 0.0
    %388 = vmatprep.subr.mxu0 0.0
    %389 = vmatpush1.msra.mxu0 0.0
    %390 = vmatprep.subr.mxu0 0.0
    %391 = vmatpush1.msra.mxu0 0.0
    %392 = vmatprep.subr.mxu0 0.0
    %393 = vmatpush1.msra.mxu0 0.0
    %394 = vmatprep.subr.mxu0 0.0
    %395 = vmatpush1.msra.mxu0 0.0
    %396 = vmatprep.subr.mxu0 0.0
    %397 = vmatpush1.msra.mxu0 0.0
    %398 = vmatprep.subr.mxu0 0.0
    %399 = vmatpush1.msra.mxu0 0.0
    %400 = vmatprep.subr.mxu0 0.0
    %401 = vmatpush1.msra.mxu0 0.0
    %402 = vmatprep.subr.mxu0 0.0
    %403 = vmatpush1.msra.mxu0 0.0
    %404 = vmatprep.subr.mxu0 0.0
    %405 = vmatpush1.msra.mxu0 0.0
    %406 = vmatprep.subr.mxu0 0.0
    %407 = vmatpush1.msra.mxu0 0.0
    %408 = vmatprep.subr.mxu0 0.0
    %409 = vmatpush1.msra.mxu0 0.0
    %410 = vmatprep.subr.mxu0 0.0
    %411 = vmatpush1.msra.mxu0 0.0
    %412 = vmatprep.subr.mxu0 0.0
    %413 = vmatpush1.msra.mxu0 0.0
    %414 = vmatprep.subr.mxu0 0.0
    %415 = vmatpush1.msra.mxu0 0.0
    %416 = vmatprep.subr.mxu0 0.0
    %417 = vmatpush1.msra.mxu0 0.0
    %418 = vmatprep.mubr.f32.mxu0 0.0
    %419 = vmatmul.mubr.f32.gmra.mrb[0].mxu0 %v85
    %v420 = vpop.f32.mrb[0].mxu0
    %v421 = vadd.f32 0.0, %v420
    %v422 = vpop.f32.mrb[0].mxu0
    %423 = vmatprep.mubr.f32.mxu0 0.0
    %424 = vmatmul.mubr.f32.gmra.mrb[0].mxu0 %v88
    %v425 = vpop.f32.mrb[0].mxu0
    %v426 = vadd.f32 0.0, %v425
    %v427 = vpop.f32.mrb[0].mxu0
    %428 = vmatprep.mubr.f32.mxu0 0.0
    %429 = vmatmul.mubr.f32.gmra.mrb[0].mxu0 %v91
    %v430 = vpop.f32.mrb[0].mxu0
    %v431 = vadd.f32 0.0, %v430
    %v432 = vpop.f32.mrb[0].mxu0
    %433 = vmatprep.mubr.f32.mxu0 0.0
    %434 = vmatmul.mubr.f32.gmra.mrb[0].mxu0 %v94
    %v435 = vpop.f32.mrb[0].mxu0
    %v436 = vadd.f32 0.0, %v435
    %v437 = vpop.f32.mrb[0].mxu0
    %438 = vdwg.mxu0
    %439 = vst [vmem:[#allocation7 + $0x40] sm:$0xff] %v421
    %440 = vst [vmem:[#allocation7 + $0x48] sm:$0xff] %v426
    %441 = vst [vmem:[#allocation7 + $0x50] sm:$0xff] %v431
    %442 = vst [vmem:[#allocation7 + $0x58] sm:$0xff] %v436
    %v443 = vadd.f32 %v314, %v421
    %v444 = vadd.f32 %v315, %v426
    %v445 = vadd.f32 %v316, %v431
    %v446 = vadd.f32 %v317, %v436
    %v447 = vmul.f32 %v421, %v421
    %v448 = vmul.f32 %v426, %v426
    %v449 = vmul.f32 %v431, %v431
    %v450 = vmul.f32 %v436, %v436
    %v451 = vadd.f32 %v322, %v447
    %v452 = vadd.f32 %v323, %v448
    %v453 = vadd.f32 %v324, %v449
    %v454 = vadd.f32 %v325, %v450
    %v455 = vlaneseq
    %v456 = vshrl.u32 %v455, 7
    %v457 = vsub.s32 3, %v456
    %v458 = vrot.slane %v45, %v457
    %vm459 = vcmp.eq.s32.totalorder %v458, %v47
    %vm460 = vcmp.eq.s32.totalorder %v458, %v48
    %vm461 = vcmp.eq.s32.totalorder %v458, %v49
    %vm462 = vcmp.eq.s32.totalorder %v458, %v50
    %vm463 = vcmp.eq.s32.totalorder %v458, %v51
    %vm464 = vcmp.eq.s32.totalorder %v458, %v52
    %vm465 = vcmp.eq.s32.totalorder %v458, %v53
    %vm466 = vcmp.eq.s32.totalorder %v458, %v54
    %v467 = vsel %vm459, 1, 0
    %v468 = vsel %vm460, 1, 0
    %v469 = vsel %vm461, 1, 0
    %v470 = vsel %vm462, 1, 0
    %v471 = vsel %vm463, 1, 0
    %v472 = vsel %vm464, 1, 0
    %v473 = vsel %vm465, 1, 0
    %v474 = vsel %vm466, 1, 0
    %v475 = vcvt.s32.f32 %v467
    %v476 = vcvt.s32.f32 %v468
    %v477 = vcvt.s32.f32 %v469
    %v478 = vcvt.s32.f32 %v470
    %v479 = vcvt.s32.f32 %v471
    %v480 = vcvt.s32.f32 %v472
    %v481 = vcvt.s32.f32 %v473
    %v482 = vcvt.s32.f32 %v474
    %483 = vmatprep.subr.mxu0 0.0
    %484 = vmatpush1.msra.mxu0 %v475
    %485 = vmatprep.subr.mxu0 0.0
    %486 = vmatpush1.msra.mxu0 %v476
    %487 = vmatprep.subr.mxu0 0.0
    %488 = vmatpush1.msra.mxu0 %v477
    %489 = vmatprep.subr.mxu0 0.0
    %490 = vmatpush1.msra.mxu0 %v478
    %491 = vmatprep.subr.mxu0 0.0
    %492 = vmatpush1.msra.mxu0 %v479
    %493 = vmatprep.subr.mxu0 0.0
    %494 = vmatpush1.msra.mxu0 %v480
    %495 = vmatprep.subr.mxu0 0.0
    %496 = vmatpush1.msra.mxu0 %v481
    %497 = vmatprep.subr.mxu0 0.0
    %498 = vmatpush1.msra.mxu0 %v482
    %499 = vmatprep.subr.mxu0 0.0
    %500 = vmatpush1.msra.mxu0 0.0
    %501 = vmatprep.subr.mxu0 0.0
    %502 = vmatpush1.msra.mxu0 0.0
    %503 = vmatprep.subr.mxu0 0.0
    %504 = vmatpush1.msra.mxu0 0.0
    %505 = vmatprep.subr.mxu0 0.0
    %506 = vmatpush1.msra.mxu0 0.0
    %507 = vmatprep.subr.mxu0 0.0
    %508 = vmatpush1.msra.mxu0 0.0
    %509 = vmatprep.subr.mxu0 0.0
    %510 = vmatpush1.msra.mxu0 0.0
    %511 = vmatprep.subr.mxu0 0.0
    %512 = vmatpush1.msra.mxu0 0.0
    %513 = vmatprep.subr.mxu0 0.0
    %514 = vmatpush1.msra.mxu0 0.0
    %515 = vmatprep.subr.mxu0 0.0
    %516 = vmatpush1.msra.mxu0 0.0
    %517 = vmatprep.subr.mxu0 0.0
    %518 = vmatpush1.msra.mxu0 0.0
    %519 = vmatprep.subr.mxu0 0.0
    %520 = vmatpush1.msra.mxu0 0.0
    %521 = vmatprep.subr.mxu0 0.0
    %522 = vmatpush1.msra.mxu0 0.0
    %523 = vmatprep.subr.mxu0 0.0
    %524 = vmatpush1.msra.mxu0 0.0
    %525 = vmatprep.subr.mxu0 0.0
    %526 = vmatpush1.msra.mxu0 0.0
    %527 = vmatprep.subr.mxu0 0.0
    %528 = vmatpush1.msra.mxu0 0.0
    %529 = vmatprep.subr.mxu0 0.0
    %530 = vmatpush1.msra.mxu0 0.0
    %531 = vmatprep.subr.mxu0 0.0
    %532 = vmatpush1.msra.mxu0 0.0
    %533 = vmatprep.subr.mxu0 0.0
    %534 = vmatpush1.msra.mxu0 0.0
    %535 = vmatprep.subr.mxu0 0.0
    %536 = vmatpush1.msra.mxu0 0.0
    %537 = vmatprep.subr.mxu0 0.0
    %538 = vmatpush1.msra.mxu0 0.0
    %539 = vmatprep.subr.mxu0 0.0
    %540 = vmatpush1.msra.mxu0 0.0
    %541 = vmatprep.subr.mxu0 0.0
    %542 = vmatpush1.msra.mxu0 0.0
    %543 = vmatprep.subr.mxu0 0.0
    %544 = vmatpush1.msra.mxu0 0.0
    %545 = vmatprep.subr.mxu0 0.0
    %546 = vmatpush1.msra.mxu0 0.0
    %547 = vmatprep.mubr.f32.mxu0 0.0
    %548 = vmatmul.mubr.f32.gmra.mrb[0].mxu0 %v85
    %v549 = vpop.f32.mrb[0].mxu0
    %v550 = vadd.f32 0.0, %v549
    %v551 = vpop.f32.mrb[0].mxu0
    %552 = vmatprep.mubr.f32.mxu0 0.0
    %553 = vmatmul.mubr.f32.gmra.mrb[0].mxu0 %v88
    %v554 = vpop.f32.mrb[0].mxu0
    %v555 = vadd.f32 0.0, %v554
    %v556 = vpop.f32.mrb[0].mxu0
    %557 = vmatprep.mubr.f32.mxu0 0.0
    %558 = vmatmul.mubr.f32.gmra.mrb[0].mxu0 %v91
    %v559 = vpop.f32.mrb[0].mxu0
    %v560 = vadd.f32 0.0, %v559
    %v561 = vpop.f32.mrb[0].mxu0
    %562 = vmatprep.mubr.f32.mxu0 0.0
    %563 = vmatmul.mubr.f32.gmra.mrb[0].mxu0 %v94
    %v564 = vpop.f32.mrb[0].mxu0
    %v565 = vadd.f32 0.0, %v564
    %v566 = vpop.f32.mrb[0].mxu0
    %567 = vdwg.mxu0
    %568 = vst [vmem:[#allocation7 + $0x60] sm:$0xff] %v550
    %569 = vst [vmem:[#allocation7 + $0x68] sm:$0xff] %v555
    %570 = vst [vmem:[#allocation7 + $0x70] sm:$0xff] %v560
    %571 = vst [vmem:[#allocation7 + $0x78] sm:$0xff] %v565
    %v572 = vadd.f32 %v443, %v550
    %v573 = vadd.f32 %v444, %v555
    %v574 = vadd.f32 %v445, %v560
    %v575 = vadd.f32 %v446, %v565
    %v576 = vmul.f32 %v550, %v550
    %v577 = vmul.f32 %v555, %v555
    %v578 = vmul.f32 %v560, %v560
    %v579 = vmul.f32 %v565, %v565
    %v580 = vadd.f32 %v451, %v576
    %v581 = vadd.f32 %v452, %v577
    %v582 = vadd.f32 %v453, %v578
    %v583 = vadd.f32 %v454, %v579
    %v584 = vlaneseq
    %v585 = vshrl.u32 %v584, 7
    %v586 = vsub.s32 4, %v585
    %v587 = vrot.slane %v45, %v586
    %vm588 = vcmp.eq.s32.totalorder %v587, %v47
    %vm589 = vcmp.eq.s32.totalorder %v587, %v48
    %vm590 = vcmp.eq.s32.totalorder %v587, %v49
    %vm591 = vcmp.eq.s32.totalorder %v587, %v50
    %vm592 = vcmp.eq.s32.totalorder %v587, %v51
    %vm593 = vcmp.eq.s32.totalorder %v587, %v52
    %vm594 = vcmp.eq.s32.totalorder %v587, %v53
    %vm595 = vcmp.eq.s32.totalorder %v587, %v54
    %v596 = vsel %vm588, 1, 0
    %v597 = vsel %vm589, 1, 0
    %v598 = vsel %vm590, 1, 0
    %v599 = vsel %vm591, 1, 0
    %v600 = vsel %vm592, 1, 0
    %v601 = vsel %vm593, 1, 0
    %v602 = vsel %vm594, 1, 0
    %v603 = vsel %vm595, 1, 0
    %v604 = vcvt.s32.f32 %v596
    %v605 = vcvt.s32.f32 %v597
    %v606 = vcvt.s32.f32 %v598
    %v607 = vcvt.s32.f32 %v599
    %v608 = vcvt.s32.f32 %v600
    %v609 = vcvt.s32.f32 %v601
    %v610 = vcvt.s32.f32 %v602
    %v611 = vcvt.s32.f32 %v603
    %612 = vmatprep.subr.mxu0 0.0
    %613 = vmatpush1.msra.mxu0 %v604
    %614 = vmatprep.subr.mxu0 0.0
    %615 = vmatpush1.msra.mxu0 %v605
    %616 = vmatprep.subr.mxu0 0.0
    %617 = vmatpush1.msra.mxu0 %v606
    %618 = vmatprep.subr.mxu0 0.0
    %619 = vmatpush1.msra.mxu0 %v607
    %620 = vmatprep.subr.mxu0 0.0
    %621 = vmatpush1.msra.mxu0 %v608
    %622 = vmatprep.subr.mxu0 0.0
    %623 = vmatpush1.msra.mxu0 %v609
    %624 = vmatprep.subr.mxu0 0.0
    %625 = vmatpush1.msra.mxu0 %v610
    %626 = vmatprep.subr.mxu0 0.0
    %627 = vmatpush1.msra.mxu0 %v611
    %628 = vmatprep.subr.mxu0 0.0
    %629 = vmatpush1.msra.mxu0 0.0
    %630 = vmatprep.subr.mxu0 0.0
    %631 = vmatpush1.msra.mxu0 0.0
    %632 = vmatprep.subr.mxu0 0.0
    %633 = vmatpush1.msra.mxu0 0.0
    %634 = vmatprep.subr.mxu0 0.0
    %635 = vmatpush1.msra.mxu0 0.0
    %636 = vmatprep.subr.mxu0 0.0
    %637 = vmatpush1.msra.mxu0 0.0
    %638 = vmatprep.subr.mxu0 0.0
    %639 = vmatpush1.msra.mxu0 0.0
    %640 = vmatprep.subr.mxu0 0.0
    %641 = vmatpush1.msra.mxu0 0.0
    %642 = vmatprep.subr.mxu0 0.0
    %643 = vmatpush1.msra.mxu0 0.0
    %644 = vmatprep.subr.mxu0 0.0
    %645 = vmatpush1.msra.mxu0 0.0
    %646 = vmatprep.subr.mxu0 0.0
    %647 = vmatpush1.msra.mxu0 0.0
    %648 = vmatprep.subr.mxu0 0.0
    %649 = vmatpush1.msra.mxu0 0.0
    %650 = vmatprep.subr.mxu0 0.0
    %651 = vmatpush1.msra.mxu0 0.0
    %652 = vmatprep.subr.mxu0 0.0
    %653 = vmatpush1.msra.mxu0 0.0
    %654 = vmatprep.subr.mxu0 0.0
    %655 = vmatpush1.msra.mxu0 0.0
    %656 = vmatprep.subr.mxu0 0.0
    %657 = vmatpush1.msra.mxu0 0.0
    %658 = vmatprep.subr.mxu0 0.0
    %659 = vmatpush1.msra.mxu0 0.0
    %660 = vmatprep.subr.mxu0 0.0
    %661 = vmatpush1.msra.mxu0 0.0
    %662 = vmatprep.subr.mxu0 0.0
    %663 = vmatpush1.msra.mxu0 0.0
    %664 = vmatprep.subr.mxu0 0.0
    %665 = vmatpush1.msra.mxu0 0.0
    %666 = vmatprep.subr.mxu0 0.0
    %667 = vmatpush1.msra.mxu0 0.0
    %668 = vmatprep.subr.mxu0 0.0
    %669 = vmatpush1.msra.mxu0 0.0
    %670 = vmatprep.subr.mxu0 0.0
    %671 = vmatpush1.msra.mxu0 0.0
    %672 = vmatprep.subr.mxu0 0.0
    %673 = vmatpush1.msra.mxu0 0.0
    %674 = vmatprep.subr.mxu0 0.0
    %675 = vmatpush1.msra.mxu0 0.0
    %676 = vmatprep.mubr.f32.mxu0 0.0
    %677 = vmatmul.mubr.f32.gmra.mrb[0].mxu0 %v85
    %v678 = vpop.f32.mrb[0].mxu0
    %v679 = vadd.f32 0.0, %v678
    %v680 = vpop.f32.mrb[0].mxu0
    %681 = vmatprep.mubr.f32.mxu0 0.0
    %682 = vmatmul.mubr.f32.gmra.mrb[0].mxu0 %v88
    %v683 = vpop.f32.mrb[0].mxu0
    %v684 = vadd.f32 0.0, %v683
    %v685 = vpop.f32.mrb[0].mxu0
    %686 = vmatprep.mubr.f32.mxu0 0.0
    %687 = vmatmul.mubr.f32.gmra.mrb[0].mxu0 %v91
    %v688 = vpop.f32.mrb[0].mxu0
    %v689 = vadd.f32 0.0, %v688
    %v690 = vpop.f32.mrb[0].mxu0
    %691 = vmatprep.mubr.f32.mxu0 0.0
    %692 = vmatmul.mubr.f32.gmra.mrb[0].mxu0 %v94
    %v693 = vpop.f32.mrb[0].mxu0
    %v694 = vadd.f32 0.0, %v693
    %v695 = vpop.f32.mrb[0].mxu0
    %696 = vdwg.mxu0
    %697 = vst [vmem:[#allocation7 + $0x80] sm:$0xff] %v679
    %698 = vst [vmem:[#allocation7 + $0x88] sm:$0xff] %v684
    %699 = vst [vmem:[#allocation7 + $0x90] sm:$0xff] %v689
    %700 = vst [vmem:[#allocation7 + $0x98] sm:$0xff] %v694
    %v701 = vadd.f32 %v572, %v679
    %v702 = vadd.f32 %v573, %v684
    %v703 = vadd.f32 %v574, %v689
    %v704 = vadd.f32 %v575, %v694
    %v705 = vmul.f32 %v679, %v679
    %v706 = vmul.f32 %v684, %v684
    %v707 = vmul.f32 %v689, %v689
    %v708 = vmul.f32 %v694, %v694
    %v709 = vadd.f32 %v580, %v705
    %v710 = vadd.f32 %v581, %v706
    %v711 = vadd.f32 %v582, %v707
    %v712 = vadd.f32 %v583, %v708
    %v713 = vlaneseq
    %v714 = vshrl.u32 %v713, 7
    %v715 = vsub.s32 5, %v714
    %v716 = vrot.slane %v45, %v715
    %vm717 = vcmp.eq.s32.totalorder %v716, %v47
    %vm718 = vcmp.eq.s32.totalorder %v716, %v48
    %vm719 = vcmp.eq.s32.totalorder %v716, %v49
    %vm720 = vcmp.eq.s32.totalorder %v716, %v50
    %vm721 = vcmp.eq.s32.totalorder %v716, %v51
    %vm722 = vcmp.eq.s32.totalorder %v716, %v52
    %vm723 = vcmp.eq.s32.totalorder %v716, %v53
    %vm724 = vcmp.eq.s32.totalorder %v716, %v54
    %v725 = vsel %vm717, 1, 0
    %v726 = vsel %vm718, 1, 0
    %v727 = vsel %vm719, 1, 0
    %v728 = vsel %vm720, 1, 0
    %v729 = vsel %vm721, 1, 0
    %v730 = vsel %vm722, 1, 0
    %v731 = vsel %vm723, 1, 0
    %v732 = vsel %vm724, 1, 0
    %v733 = vcvt.s32.f32 %v725
    %v734 = vcvt.s32.f32 %v726
    %v735 = vcvt.s32.f32 %v727
    %v736 = vcvt.s32.f32 %v728
    %v737 = vcvt.s32.f32 %v729
    %v738 = vcvt.s32.f32 %v730
    %v739 = vcvt.s32.f32 %v731
    %v740 = vcvt.s32.f32 %v732
    %741 = vmatprep.subr.mxu0 0.0
    %742 = vmatpush1.msra.mxu0 %v733
    %743 = vmatprep.subr.mxu0 0.0
    %744 = vmatpush1.msra.mxu0 %v734
    %745 = vmatprep.subr.mxu0 0.0
    %746 = vmatpush1.msra.mxu0 %v735
    %747 = vmatprep.subr.mxu0 0.0
    %748 = vmatpush1.msra.mxu0 %v736
    %749 = vmatprep.subr.mxu0 0.0
    %750 = vmatpush1.msra.mxu0 %v737
    %751 = vmatprep.subr.mxu0 0.0
    %752 = vmatpush1.msra.mxu0 %v738
    %753 = vmatprep.subr.mxu0 0.0
    %754 = vmatpush1.msra.mxu0 %v739
    %755 = vmatprep.subr.mxu0 0.0
    %756 = vmatpush1.msra.mxu0 %v740
    %757 = vmatprep.subr.mxu0 0.0
    %758 = vmatpush1.msra.mxu0 0.0
    %759 = vmatprep.subr.mxu0 0.0
    %760 = vmatpush1.msra.mxu0 0.0
    %761 = vmatprep.subr.mxu0 0.0
    %762 = vmatpush1.msra.mxu0 0.0
    %763 = vmatprep.subr.mxu0 0.0
    %764 = vmatpush1.msra.mxu0 0.0
    %765 = vmatprep.subr.mxu0 0.0
    %766 = vmatpush1.msra.mxu0 0.0
    %767 = vmatprep.subr.mxu0 0.0
    %768 = vmatpush1.msra.mxu0 0.0
    %769 = vmatprep.subr.mxu0 0.0
    %770 = vmatpush1.msra.mxu0 0.0
    %771 = vmatprep.subr.mxu0 0.0
    %772 = vmatpush1.msra.mxu0 0.0
    %773 = vmatprep.subr.mxu0 0.0
    %774 = vmatpush1.msra.mxu0 0.0
    %775 = vmatprep.subr.mxu0 0.0
    %776 = vmatpush1.msra.mxu0 0.0
    %777 = vmatprep.subr.mxu0 0.0
    %778 = vmatpush1.msra.mxu0 0.0
    %779 = vmatprep.subr.mxu0 0.0
    %780 = vmatpush1.msra.mxu0 0.0
    %781 = vmatprep.subr.mxu0 0.0
    %782 = vmatpush1.msra.mxu0 0.0
    %783 = vmatprep.subr.mxu0 0.0
    %784 = vmatpush1.msra.mxu0 0.0
    %785 = vmatprep.subr.mxu0 0.0
    %786 = vmatpush1.msra.mxu0 0.0
    %787 = vmatprep.subr.mxu0 0.0
    %788 = vmatpush1.msra.mxu0 0.0
    %789 = vmatprep.subr.mxu0 0.0
    %790 = vmatpush1.msra.mxu0 0.0
    %791 = vmatprep.subr.mxu0 0.0
    %792 = vmatpush1.msra.mxu0 0.0
    %793 = vmatprep.subr.mxu0 0.0
    %794 = vmatpush1.msra.mxu0 0.0
    %795 = vmatprep.subr.mxu0 0.0
    %796 = vmatpush1.msra.mxu0 0.0
    %797 = vmatprep.subr.mxu0 0.0
    %798 = vmatpush1.msra.mxu0 0.0
    %799 = vmatprep.subr.mxu0 0.0
    %800 = vmatpush1.msra.mxu0 0.0
    %801 = vmatprep.subr.mxu0 0.0
    %802 = vmatpush1.msra.mxu0 0.0
    %803 = vmatprep.subr.mxu0 0.0
    %804 = vmatpush1.msra.mxu0 0.0
    %805 = vmatprep.mubr.f32.mxu0 0.0
    %806 = vmatmul.mubr.f32.gmra.mrb[0].mxu0 %v85
    %v807 = vpop.f32.mrb[0].mxu0
    %v808 = vadd.f32 0.0, %v807
    %v809 = vpop.f32.mrb[0].mxu0
    %810 = vmatprep.mubr.f32.mxu0 0.0
    %811 = vmatmul.mubr.f32.gmra.mrb[0].mxu0 %v88
    %v812 = vpop.f32.mrb[0].mxu0
    %v813 = vadd.f32 0.0, %v812
    %v814 = vpop.f32.mrb[0].mxu0
    %815 = vmatprep.mubr.f32.mxu0 0.0
    %816 = vmatmul.mubr.f32.gmra.mrb[0].mxu0 %v91
    %v817 = vpop.f32.mrb[0].mxu0
    %v818 = vadd.f32 0.0, %v817
    %v819 = vpop.f32.mrb[0].mxu0
    %820 = vmatprep.mubr.f32.mxu0 0.0
    %821 = vmatmul.mubr.f32.gmra.mrb[0].mxu0 %v94
    %v822 = vpop.f32.mrb[0].mxu0
    %v823 = vadd.f32 0.0, %v822
    %v824 = vpop.f32.mrb[0].mxu0
    %825 = vdwg.mxu0
    %826 = vst [vmem:[#allocation7 + $0xa0] sm:$0xff] %v808
    %827 = vst [vmem:[#allocation7 + $0xa8] sm:$0xff] %v813
    %828 = vst [vmem:[#allocation7 + $0xb0] sm:$0xff] %v818
    %829 = vst [vmem:[#allocation7 + $0xb8] sm:$0xff] %v823
    %v830 = vadd.f32 %v701, %v808
    %v831 = vadd.f32 %v702, %v813
    %v832 = vadd.f32 %v703, %v818
    %v833 = vadd.f32 %v704, %v823
    %v834 = vmul.f32 %v808, %v808
    %v835 = vmul.f32 %v813, %v813
    %v836 = vmul.f32 %v818, %v818
    %v837 = vmul.f32 %v823, %v823
    %v838 = vadd.f32 %v709, %v834
    %v839 = vadd.f32 %v710, %v835
    %v840 = vadd.f32 %v711, %v836
    %v841 = vadd.f32 %v712, %v837
    %v842 = vlaneseq
    %v843 = vshrl.u32 %v842, 7
    %v844 = vsub.s32 6, %v843
    %v845 = vrot.slane %v45, %v844
    %vm846 = vcmp.eq.s32.totalorder %v845, %v47
    %vm847 = vcmp.eq.s32.totalorder %v845, %v48
    %vm848 = vcmp.eq.s32.totalorder %v845, %v49
    %vm849 = vcmp.eq.s32.totalorder %v845, %v50
    %vm850 = vcmp.eq.s32.totalorder %v845, %v51
    %vm851 = vcmp.eq.s32.totalorder %v845, %v52
    %vm852 = vcmp.eq.s32.totalorder %v845, %v53
    %vm853 = vcmp.eq.s32.totalorder %v845, %v54
    %v854 = vsel %vm846, 1, 0
    %v855 = vsel %vm847, 1, 0
    %v856 = vsel %vm848, 1, 0
    %v857 = vsel %vm849, 1, 0
    %v858 = vsel %vm850, 1, 0
    %v859 = vsel %vm851, 1, 0
    %v860 = vsel %vm852, 1, 0
    %v861 = vsel %vm853, 1, 0
    %v862 = vcvt.s32.f32 %v854
    %v863 = vcvt.s32.f32 %v855
    %v864 = vcvt.s32.f32 %v856
    %v865 = vcvt.s32.f32 %v857
    %v866 = vcvt.s32.f32 %v858
    %v867 = vcvt.s32.f32 %v859
    %v868 = vcvt.s32.f32 %v860
    %v869 = vcvt.s32.f32 %v861
    %870 = vmatprep.subr.mxu0 0.0
    %871 = vmatpush1.msra.mxu0 %v862
    %872 = vmatprep.subr.mxu0 0.0
    %873 = vmatpush1.msra.mxu0 %v863
    %874 = vmatprep.subr.mxu0 0.0
    %875 = vmatpush1.msra.mxu0 %v864
    %876 = vmatprep.subr.mxu0 0.0
    %877 = vmatpush1.msra.mxu0 %v865
    %878 = vmatprep.subr.mxu0 0.0
    %879 = vmatpush1.msra.mxu0 %v866
    %880 = vmatprep.subr.mxu0 0.0
    %881 = vmatpush1.msra.mxu0 %v867
    %882 = vmatprep.subr.mxu0 0.0
    %883 = vmatpush1.msra.mxu0 %v868
    %884 = vmatprep.subr.mxu0 0.0
    %885 = vmatpush1.msra.mxu0 %v869
    %886 = vmatprep.subr.mxu0 0.0
    %887 = vmatpush1.msra.mxu0 0.0
    %888 = vmatprep.subr.mxu0 0.0
    %889 = vmatpush1.msra.mxu0 0.0
    %890 = vmatprep.subr.mxu0 0.0
    %891 = vmatpush1.msra.mxu0 0.0
    %892 = vmatprep.subr.mxu0 0.0
    %893 = vmatpush1.msra.mxu0 0.0
    %894 = vmatprep.subr.mxu0 0.0
    %895 = vmatpush1.msra.mxu0 0.0
    %896 = vmatprep.subr.mxu0 0.0
    %897 = vmatpush1.msra.mxu0 0.0
    %898 = vmatprep.subr.mxu0 0.0
    %899 = vmatpush1.msra.mxu0 0.0
    %900 = vmatprep.subr.mxu0 0.0
    %901 = vmatpush1.msra.mxu0 0.0
    %902 = vmatprep.subr.mxu0 0.0
    %903 = vmatpush1.msra.mxu0 0.0
    %904 = vmatprep.subr.mxu0 0.0
    %905 = vmatpush1.msra.mxu0 0.0
    %906 = vmatprep.subr.mxu0 0.0
    %907 = vmatpush1.msra.mxu0 0.0
    %908 = vmatprep.subr.mxu0 0.0
    %909 = vmatpush1.msra.mxu0 0.0
    %910 = vmatprep.subr.mxu0 0.0
    %911 = vmatpush1.msra.mxu0 0.0
    %912 = vmatprep.subr.mxu0 0.0
    %913 = vmatpush1.msra.mxu0 0.0
    %914 = vmatprep.subr.mxu0 0.0
    %915 = vmatpush1.msra.mxu0 0.0
    %916 = vmatprep.subr.mxu0 0.0
    %917 = vmatpush1.msra.mxu0 0.0
    %918 = vmatprep.subr.mxu0 0.0
    %919 = vmatpush1.msra.mxu0 0.0
    %920 = vmatprep.subr.mxu0 0.0
    %921 = vmatpush1.msra.mxu0 0.0
    %922 = vmatprep.subr.mxu0 0.0
    %923 = vmatpush1.msra.mxu0 0.0
    %924 = vmatprep.subr.mxu0 0.0
    %925 = vmatpush1.msra.mxu0 0.0
    %926 = vmatprep.subr.mxu0 0.0
    %927 = vmatpush1.msra.mxu0 0.0
    %928 = vmatprep.subr.mxu0 0.0
    %929 = vmatpush1.msra.mxu0 0.0
    %930 = vmatprep.subr.mxu0 0.0
    %931 = vmatpush1.msra.mxu0 0.0
    %932 = vmatprep.subr.mxu0 0.0
    %933 = vmatpush1.msra.mxu0 0.0
    %934 = vmatprep.mubr.f32.mxu0 0.0
    %935 = vmatmul.mubr.f32.gmra.mrb[0].mxu0 %v85
    %v936 = vpop.f32.mrb[0].mxu0
    %v937 = vadd.f32 0.0, %v936
    %v938 = vpop.f32.mrb[0].mxu0
    %939 = vmatprep.mubr.f32.mxu0 0.0
    %940 = vmatmul.mubr.f32.gmra.mrb[0].mxu0 %v88
    %v941 = vpop.f32.mrb[0].mxu0
    %v942 = vadd.f32 0.0, %v941
    %v943 = vpop.f32.mrb[0].mxu0
    %944 = vmatprep.mubr.f32.mxu0 0.0
    %945 = vmatmul.mubr.f32.gmra.mrb[0].mxu0 %v91
    %v946 = vpop.f32.mrb[0].mxu0
    %v947 = vadd.f32 0.0, %v946
    %v948 = vpop.f32.mrb[0].mxu0
    %949 = vmatprep.mubr.f32.mxu0 0.0
    %950 = vmatmul.mubr.f32.gmra.mrb[0].mxu0 %v94
    %v951 = vpop.f32.mrb[0].mxu0
    %v952 = vadd.f32 0.0, %v951
    %v953 = vpop.f32.mrb[0].mxu0
    %954 = vdwg.mxu0
    %955 = vst [vmem:[#allocation7 + $0xc0] sm:$0xff] %v937
    %956 = vst [vmem:[#allocation7 + $0xc8] sm:$0xff] %v942
    %957 = vst [vmem:[#allocation7 + $0xd0] sm:$0xff] %v947
    %958 = vst [vmem:[#allocation7 + $0xd8] sm:$0xff] %v952
    %v959 = vadd.f32 %v830, %v937
    %v960 = vadd.f32 %v831, %v942
    %v961 = vadd.f32 %v832, %v947
    %v962 = vadd.f32 %v833, %v952
    %v963 = vmul.f32 %v937, %v937
    %v964 = vmul.f32 %v942, %v942
    %v965 = vmul.f32 %v947, %v947
    %v966 = vmul.f32 %v952, %v952
    %v967 = vadd.f32 %v838, %v963
    %v968 = vadd.f32 %v839, %v964
    %v969 = vadd.f32 %v840, %v965
    %v970 = vadd.f32 %v841, %v966
    %v971 = vlaneseq
    %v972 = vshrl.u32 %v971, 7
    %v973 = vsub.s32 7, %v972
    %v974 = vrot.slane %v45, %v973
    %vm975 = vcmp.eq.s32.totalorder %v974, %v47
    %vm976 = vcmp.eq.s32.totalorder %v974, %v48
    %vm977 = vcmp.eq.s32.totalorder %v974, %v49
    %vm978 = vcmp.eq.s32.totalorder %v974, %v50
    %vm979 = vcmp.eq.s32.totalorder %v974, %v51
    %vm980 = vcmp.eq.s32.totalorder %v974, %v52
    %vm981 = vcmp.eq.s32.totalorder %v974, %v53
    %vm982 = vcmp.eq.s32.totalorder %v974, %v54
    %v983 = vsel %vm975, 1, 0
    %v984 = vsel %vm976, 1, 0
    %v985 = vsel %vm977, 1, 0
    %v986 = vsel %vm978, 1, 0
    %v987 = vsel %vm979, 1, 0
    %v988 = vsel %vm980, 1, 0
    %v989 = vsel %vm981, 1, 0
    %v990 = vsel %vm982, 1, 0
    %v991 = vcvt.s32.f32 %v983
    %v992 = vcvt.s32.f32 %v984
    %v993 = vcvt.s32.f32 %v985
    %v994 = vcvt.s32.f32 %v986
    %v995 = vcvt.s32.f32 %v987
    %v996 = vcvt.s32.f32 %v988
    %v997 = vcvt.s32.f32 %v989
    %v998 = vcvt.s32.f32 %v990
    %999 = vmatprep.subr.mxu0 0.0
    %1000 = vmatpush1.msra.mxu0 %v991
    %1001 = vmatprep.subr.mxu0 0.0
    %1002 = vmatpush1.msra.mxu0 %v992
    %1003 = vmatprep.subr.mxu0 0.0
    %1004 = vmatpush1.msra.mxu0 %v993
    %1005 = vmatprep.subr.mxu0 0.0
    %1006 = vmatpush1.msra.mxu0 %v994
    %1007 = vmatprep.subr.mxu0 0.0
    %1008 = vmatpush1.msra.mxu0 %v995
    %1009 = vmatprep.subr.mxu0 0.0
    %1010 = vmatpush1.msra.mxu0 %v996
    %1011 = vmatprep.subr.mxu0 0.0
    %1012 = vmatpush1.msra.mxu0 %v997
    %1013 = vmatprep.subr.mxu0 0.0
    %1014 = vmatpush1.msra.mxu0 %v998
    %1015 = vmatprep.subr.mxu0 0.0
    %1016 = vmatpush1.msra.mxu0 0.0
    %1017 = vmatprep.subr.mxu0 0.0
    %1018 = vmatpush1.msra.mxu0 0.0
    %1019 = vmatprep.subr.mxu0 0.0
    %1020 = vmatpush1.msra.mxu0 0.0
    %1021 = vmatprep.subr.mxu0 0.0
    %1022 = vmatpush1.msra.mxu0 0.0
    %1023 = vmatprep.subr.mxu0 0.0
    %1024 = vmatpush1.msra.mxu0 0.0
    %1025 = vmatprep.subr.mxu0 0.0
    %1026 = vmatpush1.msra.mxu0 0.0
    %1027 = vmatprep.subr.mxu0 0.0
    %1028 = vmatpush1.msra.mxu0 0.0
    %1029 = vmatprep.subr.mxu0 0.0
    %1030 = vmatpush1.msra.mxu0 0.0
    %1031 = vmatprep.subr.mxu0 0.0
    %1032 = vmatpush1.msra.mxu0 0.0
    %1033 = vmatprep.subr.mxu0 0.0
    %1034 = vmatpush1.msra.mxu0 0.0
    %1035 = vmatprep.subr.mxu0 0.0
    %1036 = vmatpush1.msra.mxu0 0.0
    %1037 = vmatprep.subr.mxu0 0.0
    %1038 = vmatpush1.msra.mxu0 0.0
    %1039 = vmatprep.subr.mxu0 0.0
    %1040 = vmatpush1.msra.mxu0 0.0
    %1041 = vmatprep.subr.mxu0 0.0
    %1042 = vmatpush1.msra.mxu0 0.0
    %1043 = vmatprep.subr.mxu0 0.0
    %1044 = vmatpush1.msra.mxu0 0.0
    %1045 = vmatprep.subr.mxu0 0.0
    %1046 = vmatpush1.msra.mxu0 0.0
    %1047 = vmatprep.subr.mxu0 0.0
    %1048 = vmatpush1.msra.mxu0 0.0
    %1049 = vmatprep.subr.mxu0 0.0
    %1050 = vmatpush1.msra.mxu0 0.0
    %1051 = vmatprep.subr.mxu0 0.0
    %1052 = vmatpush1.msra.mxu0 0.0
    %1053 = vmatprep.subr.mxu0 0.0
    %1054 = vmatpush1.msra.mxu0 0.0
    %1055 = vmatprep.subr.mxu0 0.0
    %1056 = vmatpush1.msra.mxu0 0.0
    %1057 = vmatprep.subr.mxu0 0.0
    %1058 = vmatpush1.msra.mxu0 0.0
    %1059 = vmatprep.subr.mxu0 0.0
    %1060 = vmatpush1.msra.mxu0 0.0
    %1061 = vmatprep.subr.mxu0 0.0
    %1062 = vmatpush1.msra.mxu0 0.0
    %1063 = vmatprep.mubr.f32.mxu0 0.0
    %1064 = vmatmul.mubr.f32.gmra.mrb[0].mxu0 %v85
    %v1065 = vpop.f32.mrb[0].mxu0
    %v1066 = vadd.f32 0.0, %v1065
    %v1067 = vpop.f32.mrb[0].mxu0
    %1068 = vmatprep.mubr.f32.mxu0 0.0
    %1069 = vmatmul.mubr.f32.gmra.mrb[0].mxu0 %v88
    %v1070 = vpop.f32.mrb[0].mxu0
    %v1071 = vadd.f32 0.0, %v1070
    %v1072 = vpop.f32.mrb[0].mxu0
    %1073 = vmatprep.mubr.f32.mxu0 0.0
    %1074 = vmatmul.mubr.f32.gmra.mrb[0].mxu0 %v91
    %v1075 = vpop.f32.mrb[0].mxu0
    %v1076 = vadd.f32 0.0, %v1075
    %v1077 = vpop.f32.mrb[0].mxu0
    %1078 = vmatprep.mubr.f32.mxu0 0.0
    %1079 = vmatmul.mubr.f32.gmra.mrb[0].mxu0 %v94
    %v1080 = vpop.f32.mrb[0].mxu0
    %v1081 = vadd.f32 0.0, %v1080
    %v1082 = vpop.f32.mrb[0].mxu0
    %1083 = vdwg.mxu0
    %1084 = vst [vmem:[#allocation7 + $0xe0] sm:$0xff] %v1066
    %1085 = vst [vmem:[#allocation7 + $0xe8] sm:$0xff] %v1071
    %1086 = vst [vmem:[#allocation7 + $0xf0] sm:$0xff] %v1076
    %1087 = vst [vmem:[#allocation7 + $0xf8] sm:$0xff] %v1081
    %v1088 = vadd.f32 %v959, %v1066
    %v1089 = vadd.f32 %v960, %v1071
    %v1090 = vadd.f32 %v961, %v1076
    %v1091 = vadd.f32 %v962, %v1081
    %v1092 = vmul.f32 %v1066, %v1066
    %v1093 = vmul.f32 %v1071, %v1071
    %v1094 = vmul.f32 %v1076, %v1076
    %v1095 = vmul.f32 %v1081, %v1081
    %v1096 = vadd.f32 %v967, %v1092
    %v1097 = vadd.f32 %v968, %v1093
    %v1098 = vadd.f32 %v969, %v1094
    %v1099 = vadd.f32 %v970, %v1095
    %v1100 = vmul.f32 %v1088, %v1088
    %v1101 = vmul.f32 %v1089, %v1089
    %v1102 = vmul.f32 %v1090, %v1090
    %v1103 = vmul.f32 %v1091, %v1091
    %v1104 = vsub.f32 %v1100, %v1096
    %v1105 = vsub.f32 %v1101, %v1097
    %v1106 = vsub.f32 %v1102, %v1098
    %v1107 = vsub.f32 %v1103, %v1099
    %v1108 = vadd.f32 %v1104, %v1105
    %v1109 = vadd.f32 %v1108, %v1106
    %v1110 = vadd.f32 %v1109, %v1107
    %v1111 = vrot.slane %v1110, 4
    %v1112 = vadd.f32 %v1110, %v1111
    %v1113 = vrot.slane %v1112, 2
    %v1114 = vadd.f32 %v1112, %v1113
    %v1115 = vrot.slane %v1114, 1
    %v1116 = vadd.f32 %v1114, %v1115
    %v1117 = vmul.f32 %v1116, 0.5
    %v1118 = vxor.u32 %v1117, 2147483648
    %v1119 = vmul.f32 %v1118, 1.442695
    %v1120 = vpow.pop %v1119
    %v1121 = vadd.f32 %v1120, 1.0
    %v1122 = vrcp.pop %v1121
    %v1123 = vmul.f32 1.0, %v1122
    %1124 = vst [vmem:[#allocation8] sm:$0x1] %v1123
    // Predicated region
    $region18: #{tpu_custom_call.1} parent=1 // pred_check
      _
    $region19: #{tpu_custom_call.1} parent=1 // pred_check_branch
      %1126 = sbr.rel (0) target = $region21
    $region20: #{tpu_custom_call.1} parent=1 // pred_region
      %s1128 = ssub.s32 4096, 4096
      %1129 = vsyncadd [#allocation4], %s1128
      %s1130 = sshll.u32 [#allocation7], 4
      %s1131 = int_to_ptr.vmem [resolvable:$true] %s1130
      %1136 = dma.vmem_to_hbm [thread:$0]  %s1131, 4096, %s2, [#allocation4], 128, 128, 8
    $region21: #{tpu_custom_call.1} parent=1 // pred_fallthru
      _
    // Predicated region
    $region22: #{tpu_custom_call.1} parent=1 // pred_check
      _
    $region23: #{tpu_custom_call.1} parent=1 // pred_check_branch
      %1138 = sbr.rel (0) target = $region25
    $region24: #{tpu_custom_call.1} parent=1 // pred_region
      %s1140 = ssub.s32 16, 16
      %1141 = vsyncadd [#allocation9], %s1140
      %s1143 = sshll.u32 [#allocation8], 4
      %s1144 = int_to_ptr.vmem [resolvable:$true] %s1143
      %1146 = dma.vmem_to_hbm [thread:$0]  %s1144, 16, %s3, [#allocation9]
    $region25: #{tpu_custom_call.1} parent=1 // pred_fallthru
      _
    // Predicated region
    $region26: #{tpu_custom_call.1} parent=1 // pred_check
      _
    $region27: #{tpu_custom_call.1} parent=1 // pred_check_branch
      %1148 = sbr.rel (0) target = $region29
    $region28: #{tpu_custom_call.1} parent=1 // pred_region
      %1149 = dma.done [#allocation4], 4096
    $region29: #{tpu_custom_call.1} parent=1 // pred_fallthru
      _
    // Predicated region
    $region30: #{tpu_custom_call.1} parent=1 // pred_check
      _
    $region31: #{tpu_custom_call.1} parent=1 // pred_check_branch
      %1151 = sbr.rel (0) target = $region33
    $region32: #{tpu_custom_call.1} parent=1 // pred_region
      %1152 = dma.done [#allocation9], 16
    $region33: #{tpu_custom_call.1} parent=1 // pred_fallthru
      _
    %1153 = vsyncpa [#allocation3], 1
    %1154 = vsyncpa [#allocation6], 1
    %1155 = vsyncpa [#allocation4], 1
    %1156 = vsyncpa [#allocation9], 1

</llo_original>
